<compile_context>
chip_gen: v7x
topology: tpu7x:2x2x1
jax: 0.10.0
libtpu: 0.0.40
codegen_flags: <defaults>
</compile_context>

<pallas_src>
import functools

import jax
import jax.numpy as jnp
from jax import lax
from jax.experimental import pallas as pl
from jax.experimental.pallas import tpu as pltpu

LN_EPS = 1e-5  # nn.LayerNorm default
_LANE = 128
_SUBLANE = 8


def _round_up(x, m):
    return ((x + m - 1) // m) * m


def _prenorm_linear_kernel(x_ref, gamma_ref, beta_ref, w_ref, wb_ref, o_ref,
                           *, d_true, matmul_dtype):
    # x_ref: (TM, Dp); gamma/beta: (1, Dp); w: (Dp, TN); wb: (1, TN); o: (TM, TN)
    xf = x_ref[...].astype(jnp.float32)      # LN statistics in f32 always
    d_pad = xf.shape[-1]
    inv_d = jnp.float32(1.0 / d_true)

    # Lane padding (if any) is zero, so sums over the padded axis already
    # equal sums over the true D elements; only `centered` needs masking.
    mean = jnp.sum(xf, axis=-1, keepdims=True) * inv_d
    if d_pad == d_true:
        centered = xf - mean
    else:
        lane = lax.broadcasted_iota(jnp.int32, xf.shape, dimension=xf.ndim - 1)
        centered = jnp.where(lane < d_true, xf - mean, 0.0)

    var = jnp.sum(centered * centered, axis=-1, keepdims=True) * inv_d
    x_norm = centered * lax.rsqrt(var + LN_EPS)
    y = (x_norm * gamma_ref[...].astype(jnp.float32)
         + beta_ref[...].astype(jnp.float32))

    # fn = Linear(dim -> hidden): MXU matmul, f32 accumulation.  W's padded
    # rows are zero so padded lanes of y can never contribute.
    out = jnp.dot(y.astype(matmul_dtype), w_ref[...],
                  preferred_element_type=jnp.float32)
    out = out + wb_ref[...].astype(jnp.float32)
    o_ref[...] = out.astype(o_ref.dtype)


def prenorm_linear(x, gamma, beta, w, wb, *,
                   block_rows=256, block_h=512, matmul_dtype=None):
    """PreNorm(dim, Linear(dim, hidden)) forward.

    x: (B, S, D); gamma/beta: (D,); w: (D, H); wb: (H,)  ->  (B, S, H)
    """
    B, S, D = x.shape
    Dw, H = w.shape
    assert Dw == D
    N = B * S
    out_dtype = x.dtype

    if matmul_dtype is None:
        # Keep native precision for f32 inputs (tight match vs. reference);
        # if inputs/weights are already bf16, feed the MXU bf16 directly.
        matmul_dtype = (jnp.bfloat16 if (x.dtype == jnp.bfloat16
                                         or w.dtype == jnp.bfloat16)
                        else w.dtype)
    matmul_dtype = jnp.dtype(matmul_dtype)

    # ---- Tile sizing: lane-dense (128-multiple) last dims, 8-aligned rows.
    Dp = _round_up(D, _LANE)                                   # full reduction dim per block
    TN = min(_round_up(block_h, _LANE), _round_up(H, _LANE))   # H tile
    Hp = _round_up(H, TN)
    TM = max(_SUBLANE,
             min(_round_up(block_rows, _SUBLANE), _round_up(N, _SUBLANE)))
    Np = _round_up(N, TM)

    # ---- Zero-pad operands to tiled shapes (padding is benign: padded W
    # rows/cols are zero; padded rows/cols of the output are sliced away).
    x2 = jnp.zeros((Np, Dp), x.dtype).at[:N, :D].set(x.reshape(N, D))
    gamma2 = jnp.zeros((1, Dp), gamma.dtype).at[0, :D].set(gamma)
    beta2 = jnp.zeros((1, Dp), beta.dtype).at[0, :D].set(beta)
    w2 = jnp.zeros((Dp, Hp), matmul_dtype).at[:D, :H].set(w.astype(matmul_dtype))
    wb2 = jnp.zeros((1, Hp), wb.dtype).at[0, :H].set(wb)

    grid = (Np // TM, Hp // TN)

    # Explicit VMEM budget: double-buffered x/out/W tiles (+ params), clamped
    # to leave headroom on v7x's 64 MiB per-core VMEM.
    tile_bytes = (2 * TM * Dp * x2.dtype.itemsize
                  + 2 * TM * TN * jnp.dtype(out_dtype).itemsize
                  + 2 * Dp * TN * matmul_dtype.itemsize
                  + 2 * (Dp + TN) * 4)
    vmem_limit = int(min(max(2 * tile_bytes, 32 * 1024 * 1024),
                         48 * 1024 * 1024))

    cost = pl.CostEstimate(
        flops=2 * N * D * H,
        transcendentals=N,  # one rsqrt per row
        bytes_accessed=(N * D * x.dtype.itemsize
                        + D * H * matmul_dtype.itemsize
                        + N * H * jnp.dtype(out_dtype).itemsize),
    )

    kernel = functools.partial(_prenorm_linear_kernel,
                               d_true=D, matmul_dtype=matmul_dtype)

    out2 = pl.pallas_call(
        kernel,
        out_shape=jax.ShapeDtypeStruct((Np, Hp), out_dtype),
        grid=grid,
        in_specs=[
            pl.BlockSpec((TM, Dp), lambda i, j: (i, 0)),   # x row tile
            pl.BlockSpec((1, Dp), lambda i, j: (0, 0)),    # gamma (resident)
            pl.BlockSpec((1, Dp), lambda i, j: (0, 0)),    # beta  (resident)
            pl.BlockSpec((Dp, TN), lambda i, j: (0, j)),   # W column tile
            pl.BlockSpec((1, TN), lambda i, j: (0, j)),    # bias column tile
        ],
        out_specs=pl.BlockSpec((TM, TN), lambda i, j: (i, j)),
        compiler_params=pltpu.CompilerParams(
            dimension_semantics=("parallel", "parallel"),
            vmem_limit_bytes=vmem_limit),
        cost_estimate=cost,
    )(x2, gamma2, beta2, w2, wb2)

    return out2[:N, :H].reshape(B, S, H)


def reference(x, gamma, beta, w, wb):
    x32 = x.astype(jnp.float32)
    mean = jnp.mean(x32, axis=-1, keepdims=True)
    var = jnp.mean((x32 - mean) ** 2, axis=-1, keepdims=True)
    y = ((x32 - mean) * lax.rsqrt(var + LN_EPS) * gamma.astype(jnp.float32)
         + beta.astype(jnp.float32))
    out = y @ w.astype(jnp.float32) + wb.astype(jnp.float32)
    return out.astype(x.dtype)


if __name__ == "__main__":
    key = jax.random.PRNGKey(0)
    kx, kg, kb, kw, kwb = jax.random.split(key, 5)

    B, S, D, H = 2, 8, 32, 32

    x = jax.random.normal(kx, (B, S, D), dtype=jnp.float32)
    # LayerNorm params (nn.LayerNorm inits gamma=1, beta=0; perturbed so the
    # affine path is exercised).
    gamma = 1.0 + 0.1 * jax.random.normal(kg, (D,), dtype=jnp.float32)
    beta = 0.1 * jax.random.normal(kb, (D,), dtype=jnp.float32)
    # fn = Linear(D, H) params.
    w = jax.random.normal(kw, (D, H), dtype=jnp.float32) * (1.0 / jnp.sqrt(D))
    wb = 0.1 * jax.random.normal(kwb, (H,), dtype=jnp.float32)

    ref = reference(x, gamma, beta, w, wb)

    # 1) Native-precision path (f32 MXU inputs): tight match vs. reference.
    out = prenorm_linear(x, gamma, beta, w, wb)
    jax.block_until_ready(out)
    assert out.shape == (B, S, H)
    assert jnp.allclose(out, ref, atol=1e-4, rtol=1e-4), "f32 path mismatch"

    # 2) bf16-MXU fast path (the v6e/v7x optimization): looser tolerance,
    #    LN statistics stay f32 so only the matmul inputs are rounded.
    out_bf16 = prenorm_linear(x, gamma, beta, w, wb, matmul_dtype=jnp.bfloat16)
    jax.block_until_ready(out_bf16)
    assert jnp.allclose(out_bf16, ref, atol=5e-2, rtol=5e-2), "bf16 path mismatch"

    print("KERNEL_OK")
</pallas_src>

<mosaic_0001>
module attributes {stable_mosaic.version = 11 : i64} {
  func.func @_prenorm_linear_kernel(%arg0: i32, %arg1: i32, %arg2: memref<16x128xf32, #tpu.memory_space<vmem>>, %arg3: memref<1x128xf32, #tpu.memory_space<vmem>>, %arg4: memref<1x128xf32, #tpu.memory_space<vmem>>, %arg5: memref<128x128xf32, #tpu.memory_space<vmem>>, %arg6: memref<1x128xf32, #tpu.memory_space<vmem>>, %arg7: memref<16x128xf32, #tpu.memory_space<vmem>>) attributes {dimension_semantics = [#tpu.dimension_semantics<parallel>, #tpu.dimension_semantics<parallel>], iteration_bounds = array<i64: 1, 1>, scalar_prefetch = 0 : i64, scratch_operands = 0 : i64, tpu.core_type = #tpu.core_type<tc>, window_params = [{transform_indices = @transform_0, window_bounds = array<i64: 16, 128>}, {pipeline_mode = #tpu.pipeline_mode<synchronous>, transform_indices = @transform_1, window_bounds = array<i64: 1, 128>}, {pipeline_mode = #tpu.pipeline_mode<synchronous>, transform_indices = @transform_2, window_bounds = array<i64: 1, 128>}, {transform_indices = @transform_3, window_bounds = array<i64: 128, 128>}, {transform_indices = @transform_4, window_bounds = array<i64: 1, 128>}, {transform_indices = @transform_5, window_bounds = array<i64: 16, 128>}]} {
    %c0 = arith.constant 0 : index
    %c0_0 = arith.constant 0 : index
    %0 = vector.load %arg2[%c0, %c0_0] : memref<16x128xf32, #tpu.memory_space<vmem>>, vector<16x128xf32>
    %cst = arith.constant dense<0.000000e+00> : vector<16xf32>
    %1 = vector.multi_reduction <add>, %0, %cst [1] : vector<16x128xf32> to vector<16xf32>
    %2 = vector.shape_cast %1 : vector<16xf32> to vector<16x1xf32>
    %cst_1 = arith.constant 3.125000e-02 : f32
    %3 = vector.broadcast %cst_1 : f32 to vector<16x1xf32>
    %4 = arith.mulf %2, %3 : vector<16x1xf32>
    %5 = tpu.iota {dimensions = array<i32: 1>} : vector<16x128xi32>
    %c32_i32 = arith.constant 32 : i32
    %6 = vector.broadcast %c32_i32 : i32 to vector<16x128xi32>
    %7 = arith.cmpi slt, %5, %6 : vector<16x128xi32>
    %8 = vector.broadcast %4 : vector<16x1xf32> to vector<16x128xf32>
    %9 = arith.subf %0, %8 : vector<16x128xf32>
    %cst_2 = arith.constant 0.000000e+00 : f32
    %10 = vector.broadcast %cst_2 : f32 to vector<16x128xf32>
    %11 = arith.select %7, %9, %10 : vector<16x128xi1>, vector<16x128xf32>
    %12 = arith.mulf %11, %11 : vector<16x128xf32>
    %cst_3 = arith.constant dense<0.000000e+00> : vector<16xf32>
    %13 = vector.multi_reduction <add>, %12, %cst_3 [1] : vector<16x128xf32> to vector<16xf32>
    %14 = vector.shape_cast %13 : vector<16xf32> to vector<16x1xf32>
    %cst_4 = arith.constant 3.125000e-02 : f32
    %15 = vector.broadcast %cst_4 : f32 to vector<16x1xf32>
    %16 = arith.mulf %14, %15 : vector<16x1xf32>
    %cst_5 = arith.constant 9.99999974E-6 : f32
    %17 = vector.broadcast %cst_5 : f32 to vector<16x1xf32>
    %18 = arith.addf %16, %17 : vector<16x1xf32>
    %19 = math.rsqrt %18 : vector<16x1xf32>
    %20 = vector.broadcast %19 : vector<16x1xf32> to vector<16x128xf32>
    %21 = arith.mulf %11, %20 : vector<16x128xf32>
    %c0_6 = arith.constant 0 : index
    %c0_7 = arith.constant 0 : index
    %22 = vector.load %arg3[%c0_6, %c0_7] : memref<1x128xf32, #tpu.memory_space<vmem>>, vector<1x128xf32>
    %23 = vector.broadcast %22 : vector<1x128xf32> to vector<16x128xf32>
    %24 = arith.mulf %21, %23 : vector<16x128xf32>
    %c0_8 = arith.constant 0 : index
    %c0_9 = arith.constant 0 : index
    %25 = vector.load %arg4[%c0_8, %c0_9] : memref<1x128xf32, #tpu.memory_space<vmem>>, vector<1x128xf32>
    %26 = vector.broadcast %25 : vector<1x128xf32> to vector<16x128xf32>
    %27 = arith.addf %24, %26 : vector<16x128xf32>
    %c0_10 = arith.constant 0 : index
    %c0_11 = arith.constant 0 : index
    %28 = vector.load %arg5[%c0_10, %c0_11] : memref<128x128xf32, #tpu.memory_space<vmem>>, vector<128x128xf32>
    %cst_12 = arith.constant dense<0.000000e+00> : vector<16x128xf32>
    %29 = tpu.matmul %27, %28, %cst_12 {dimension_numbers = #tpu.dot_dimension_numbers<[1], [0], [0], [1], [0, 0, 1, 1], [], []>} : vector<16x128xf32>, vector<128x128xf32>, vector<16x128xf32> -> vector<16x128xf32>
    %c0_13 = arith.constant 0 : index
    %c0_14 = arith.constant 0 : index
    %30 = vector.load %arg6[%c0_13, %c0_14] : memref<1x128xf32, #tpu.memory_space<vmem>>, vector<1x128xf32>
    %31 = vector.broadcast %30 : vector<1x128xf32> to vector<16x128xf32>
    %32 = arith.addf %29, %31 : vector<16x128xf32>
    %c0_15 = arith.constant 0 : index
    %c0_16 = arith.constant 0 : index
    %33 = vector.load %arg7[%c0_15, %c0_16] : memref<16x128xf32, #tpu.memory_space<vmem>>, vector<16x128xf32>
    tpu.vector_store %arg7[%c0_15, %c0_16], %32 {strides = array<i32>} : memref<16x128xf32, #tpu.memory_space<vmem>>, vector<16x128xf32>,
    return
  }
  func.func @transform_0(%arg0: i32, %arg1: i32) -> (i32, i32) {
    %c0_i32 = arith.constant 0 : i32
    %c0_i32_0 = arith.constant 0 : i32
    return %arg0, %c0_i32 : i32, i32
  }
  func.func @transform_1(%arg0: i32, %arg1: i32) -> (i32, i32) {
    %c0_i32 = arith.constant 0 : i32
    %c0_i32_0 = arith.constant 0 : i32
    %c0_i32_1 = arith.constant 0 : i32
    return %c0_i32, %c0_i32_0 : i32, i32
  }
  func.func @transform_2(%arg0: i32, %arg1: i32) -> (i32, i32) {
    %c0_i32 = arith.constant 0 : i32
    %c0_i32_0 = arith.constant 0 : i32
    %c0_i32_1 = arith.constant 0 : i32
    return %c0_i32, %c0_i32_0 : i32, i32
  }
  func.func @transform_3(%arg0: i32, %arg1: i32) -> (i32, i32) {
    %c0_i32 = arith.constant 0 : i32
    %c0_i32_0 = arith.constant 0 : i32
    return %c0_i32, %arg1 : i32, i32
  }
  func.func @transform_4(%arg0: i32, %arg1: i32) -> (i32, i32) {
    %c0_i32 = arith.constant 0 : i32
    %c0_i32_0 = arith.constant 0 : i32
    return %c0_i32, %arg1 : i32, i32
  }
  func.func @transform_5(%arg0: i32, %arg1: i32) -> (i32, i32) {
    %c0_i32 = arith.constant 0 : i32
    return %arg0, %arg1 : i32, i32
  }
}

</mosaic_0001>

<llo_original>
// kernel: tpu_custom_call.1
$region0: #{tpu_custom_call.1}
  #allocation0 [shape = 'u32[]', space=smem, size = 0x4, offset = 0x4, fixed_abs, tag = 'smem constant byte address 0x4 - core index']
  #allocation1 [shape = 'u32[144,128]{1,0:T(1,128)}', space=vmem, size = 0x12000, scoped, tag = 'internal scratch']
  %s0 = inlined_call_operand.hbm [shape: f32[16,128], index: 0, kind: input, shape index: {}]
  %s1 = inlined_call_operand.vmem [shape: f32[1,128], index: 1, kind: input, shape index: {}]
  %s2 = inlined_call_operand.vmem [shape: f32[1,128], index: 2, kind: input, shape index: {}]
  %s3 = inlined_call_operand.hbm [shape: f32[128,128], index: 3, kind: input, shape index: {}]
  %s4 = inlined_call_operand.vmem [shape: f32[1,128], index: 4, kind: input, shape index: {}]
  %s5 = inlined_call_operand.hbm [shape: f32[16,128], index: 5, kind: output, shape index: {}]
  %s6 = sld [smem:[#allocation0]]
  $region38: #{tpu_custom_call.1} parent=0
    _
  %s8 = ssub.s32 1, %s6
  %s9 = scalar_select 0, %s8, %s6
  $region1: #{tpu_custom_call.1} parent=0
    #allocation2 [shape = 'u8[8192]{0}', space=vmem, size = 0x2000, scoped, tag = 'input window, operand 0, single buffered']
    #allocation3 [shape = 's32[1]{0}', space=sflag, size = 0x4, scoped, tag = 'scoped memory for tpu_custom_call.1']
    #allocation4 [shape = 's32[1]{0}', space=sflag, size = 0x4, scoped, tag = 'scoped memory for tpu_custom_call.1']
    #allocation5 [shape = 'u8[65536]{0}', space=vmem, size = 0x10000, scoped, tag = 'input window, operand 3, single buffered']
    #allocation6 [shape = 's32[1]{0}', space=sflag, size = 0x4, scoped, tag = 'scoped memory for tpu_custom_call.1']
    #allocation7 [shape = 'u8[8192]{0}', space=vmem, size = 0x2000, scoped, tag = 'output window, operand 0, single buffered']
    %10 = vsyncpa [#allocation3], 0
    %11 = vsyncpa [#allocation6], 0
    %12 = vsyncpa [#allocation4], 0
    // Predicated region
    $region2: #{tpu_custom_call.1} parent=1 // pred_check
      _
    $region3: #{tpu_custom_call.1} parent=1 // pred_check_branch
      %14 = sbr.rel (0) target = $region5
    $region4: #{tpu_custom_call.1} parent=1 // pred_region
      %s16 = ssub.s32 256, 256
      %17 = vsyncadd [#allocation3], %s16
      %s18 = sshll.u32 [#allocation2], 4
      %s19 = int_to_ptr.vmem [resolvable:$true] %s18
      %24 = dma.hbm_to_vmem [thread:$0]  %s0, 256, %s19, [#allocation3], 128, 128, 8
    $region5: #{tpu_custom_call.1} parent=1 // pred_fallthru
      _
    // Predicated region
    $region6: #{tpu_custom_call.1} parent=1 // pred_check
      _
    $region7: #{tpu_custom_call.1} parent=1 // pred_check_branch
      %26 = sbr.rel (0) target = $region9
    $region8: #{tpu_custom_call.1} parent=1 // pred_region
      _
    $region9: #{tpu_custom_call.1} parent=1 // pred_fallthru
      _
    // Predicated region
    $region10: #{tpu_custom_call.1} parent=1 // pred_check
      _
    $region11: #{tpu_custom_call.1} parent=1 // pred_check_branch
      %28 = sbr.rel (0) target = $region13
    $region12: #{tpu_custom_call.1} parent=1 // pred_region
      _
    $region13: #{tpu_custom_call.1} parent=1 // pred_fallthru
      _
    // Predicated region
    $region14: #{tpu_custom_call.1} parent=1 // pred_check
      _
    $region15: #{tpu_custom_call.1} parent=1 // pred_check_branch
      %30 = sbr.rel (0) target = $region17
    $region16: #{tpu_custom_call.1} parent=1 // pred_region
      %s32 = ssub.s32 2048, 2048
      %33 = vsyncadd [#allocation6], %s32
      %s34 = sshll.u32 [#allocation5], 4
      %s35 = int_to_ptr.vmem [resolvable:$true] %s34
      %40 = dma.hbm_to_vmem [thread:$0]  %s3, 2048, %s35, [#allocation6], 128, 128, 8
    $region17: #{tpu_custom_call.1} parent=1 // pred_fallthru
      _
    // Predicated region
    $region18: #{tpu_custom_call.1} parent=1 // pred_check
      _
    $region19: #{tpu_custom_call.1} parent=1 // pred_check_branch
      %42 = sbr.rel (0) target = $region21
    $region20: #{tpu_custom_call.1} parent=1 // pred_region
      _
    $region21: #{tpu_custom_call.1} parent=1 // pred_fallthru
      _
    // Predicated region
    $region22: #{tpu_custom_call.1} parent=1 // pred_check
      _
    $region23: #{tpu_custom_call.1} parent=1 // pred_check_branch
      %44 = sbr.rel (0) target = $region25
    $region24: #{tpu_custom_call.1} parent=1 // pred_region
      %45 = dma.done [#allocation3], 256
    $region25: #{tpu_custom_call.1} parent=1 // pred_fallthru
      _
    // Predicated region
    $region26: #{tpu_custom_call.1} parent=1 // pred_check
      _
    $region27: #{tpu_custom_call.1} parent=1 // pred_check_branch
      %47 = sbr.rel (0) target = $region29
    $region28: #{tpu_custom_call.1} parent=1 // pred_region
      %48 = dma.done [#allocation6], 2048
    $region29: #{tpu_custom_call.1} parent=1 // pred_fallthru
      _
    %v49 = vld [vmem:[#allocation2] sm:$0xff]
    %v50 = vld [vmem:[#allocation2 + $0x8] sm:$0xff]
    %51 = vadd.xlane.f32.xlu0 %v49
    %v52 = vpop.xlane.xlu0 %51
    %53 = vadd.xlane.f32.xlu0 %v50
    %v54 = vpop.xlane.xlu0 %53
    %v55 = vmul.f32 %v52, 0.03125
    %v56 = vmul.f32 %v54, 0.03125
    %v57 = vlaneseq
    %v58 = vand.u32 %v57, 127
    %vm59 = vcmp.lt.s32.totalorder %v58, 32
    %v60 = vsub.f32 %v49, %v55
    %v61 = vsub.f32 %v50, %v56
    %v62 = vsel %vm59, %v60, 0.0
    %v63 = vsel %vm59, %v61, 0.0
    %v64 = vmul.f32 %v62, %v62
    %v65 = vmul.f32 %v63, %v63
    %66 = vadd.xlane.f32.xlu0 %v64
    %v67 = vpop.xlane.xlu0 %66
    %68 = vadd.xlane.f32.xlu0 %v65
    %v69 = vpop.xlane.xlu0 %68
    %v70 = vmul.f32 %v67, 0.03125
    %v71 = vmul.f32 %v69, 0.03125
    %v72 = vadd.f32 %v70, 1e-05
    %v73 = vadd.f32 %v71, 1e-05
    %v74 = vrsqrt.pop %v72
    %v75 = vrsqrt.pop %v73
    %v76 = vmul.f32 %v62, %v74
    %v77 = vmul.f32 %v63, %v75
    %v78 = vld [vmem:[%s1] sm:$0x1]
    %v80 = vlaneseq
    %v81 = vshrl.u32 %v80, 7
    %v82 = vsub.s32 0, %v81
    %v83 = vrot.slane %v78, %v82
    %v85 = vmul.f32 %v76, %v83
    %v86 = vmul.f32 %v77, %v83
    %v87 = vld [vmem:[%s2] sm:$0x1]
    %v89 = vlaneseq
    %v90 = vshrl.u32 %v89, 7
    %v91 = vsub.s32 0, %v90
    %v92 = vrot.slane %v87, %v91
    %v94 = vadd.f32 %v85, %v92
    %v95 = vadd.f32 %v86, %v92
    %v96 = vld [vmem:[#allocation5] sm:$0xff]
    %v97 = vld [vmem:[#allocation5 + $0x8] sm:$0xff]
    %v98 = vld [vmem:[#allocation5 + $0x10] sm:$0xff]
    %v99 = vld [vmem:[#allocation5 + $0x18] sm:$0xff]
    %v100 = vld [vmem:[#allocation5 + $0x20] sm:$0xff]
    %v101 = vld [vmem:[#allocation5 + $0x28] sm:$0xff]
    %v102 = vld [vmem:[#allocation5 + $0x30] sm:$0xff]
    %v103 = vld [vmem:[#allocation5 + $0x38] sm:$0xff]
    %v104 = vld [vmem:[#allocation5 + $0x40] sm:$0xff]
    %v105 = vld [vmem:[#allocation5 + $0x48] sm:$0xff]
    %v106 = vld [vmem:[#allocation5 + $0x50] sm:$0xff]
    %v107 = vld [vmem:[#allocation5 + $0x58] sm:$0xff]
    %v108 = vld [vmem:[#allocation5 + $0x60] sm:$0xff]
    %v109 = vld [vmem:[#allocation5 + $0x68] sm:$0xff]
    %v110 = vld [vmem:[#allocation5 + $0x70] sm:$0xff]
    %v111 = vld [vmem:[#allocation5 + $0x78] sm:$0xff]
    %v112 = vld [vmem:[%s4] sm:$0x1]
    %v114 = vlaneseq
    %v115 = vshrl.u32 %v114, 7
    %v116 = vsub.s32 0, %v115
    %v117 = vrot.slane %v112, %v116
    %119 = vmatprep.subr.mxu0 0.0
    %120 = vmatpush1.msra.mxu0 %v96
    %121 = vmatprep.subr.mxu0 0.0
    %122 = vmatpush1.msra.mxu0 %v97
    %123 = vmatprep.subr.mxu0 0.0
    %124 = vmatpush1.msra.mxu0 %v98
    %125 = vmatprep.subr.mxu0 0.0
    %126 = vmatpush1.msra.mxu0 %v99
    %127 = vmatprep.subr.mxu0 0.0
    %128 = vmatpush1.msra.mxu0 %v100
    %129 = vmatprep.subr.mxu0 0.0
    %130 = vmatpush1.msra.mxu0 %v101
    %131 = vmatprep.subr.mxu0 0.0
    %132 = vmatpush1.msra.mxu0 %v102
    %133 = vmatprep.subr.mxu0 0.0
    %134 = vmatpush1.msra.mxu0 %v103
    %135 = vmatprep.subr.mxu0 0.0
    %136 = vmatpush1.msra.mxu0 %v104
    %137 = vmatprep.subr.mxu0 0.0
    %138 = vmatpush1.msra.mxu0 %v105
    %139 = vmatprep.subr.mxu0 0.0
    %140 = vmatpush1.msra.mxu0 %v106
    %141 = vmatprep.subr.mxu0 0.0
    %142 = vmatpush1.msra.mxu0 %v107
    %143 = vmatprep.subr.mxu0 0.0
    %144 = vmatpush1.msra.mxu0 %v108
    %145 = vmatprep.subr.mxu0 0.0
    %146 = vmatpush1.msra.mxu0 %v109
    %147 = vmatprep.subr.mxu0 0.0
    %148 = vmatpush1.msra.mxu0 %v110
    %149 = vmatprep.subr.mxu0 0.0
    %150 = vmatpush1.msra.mxu0 %v111
    %151 = vmatprep.subr.mxu0 0.0
    %152 = vmatpush1.msra.mxu0 0.0
    %153 = vmatprep.subr.mxu0 0.0
    %154 = vmatpush1.msra.mxu0 0.0
    %155 = vmatprep.subr.mxu0 0.0
    %156 = vmatpush1.msra.mxu0 0.0
    %157 = vmatprep.subr.mxu0 0.0
    %158 = vmatpush1.msra.mxu0 0.0
    %159 = vmatprep.subr.mxu0 0.0
    %160 = vmatpush1.msra.mxu0 0.0
    %161 = vmatprep.subr.mxu0 0.0
    %162 = vmatpush1.msra.mxu0 0.0
    %163 = vmatprep.subr.mxu0 0.0
    %164 = vmatpush1.msra.mxu0 0.0
    %165 = vmatprep.subr.mxu0 0.0
    %166 = vmatpush1.msra.mxu0 0.0
    %167 = vmatprep.subr.mxu0 0.0
    %168 = vmatpush1.msra.mxu0 0.0
    %169 = vmatprep.subr.mxu0 0.0
    %170 = vmatpush1.msra.mxu0 0.0
    %171 = vmatprep.subr.mxu0 0.0
    %172 = vmatpush1.msra.mxu0 0.0
    %173 = vmatprep.subr.mxu0 0.0
    %174 = vmatpush1.msra.mxu0 0.0
    %175 = vmatprep.subr.mxu0 0.0
    %176 = vmatpush1.msra.mxu0 0.0
    %177 = vmatprep.subr.mxu0 0.0
    %178 = vmatpush1.msra.mxu0 0.0
    %179 = vmatprep.subr.mxu0 0.0
    %180 = vmatpush1.msra.mxu0 0.0
    %181 = vmatprep.subr.mxu0 0.0
    %182 = vmatpush1.msra.mxu0 0.0
    %183 = vmatprep.mubr.f32.mxu0 0.0
    %184 = vmatmul.mubr.f32.gmra.mrb[0].mxu0 %v94
    %v185 = vpop.f32.mrb[0].mxu0
    %v186 = vadd.f32 %v117, %v185
    %v187 = vpop.f32.mrb[0].mxu0
    %188 = vmatprep.mubr.f32.mxu0 0.0
    %189 = vmatmul.mubr.f32.gmra.mrb[0].mxu0 %v95
    %v190 = vpop.f32.mrb[0].mxu0
    %v191 = vadd.f32 %v117, %v190
    %v192 = vpop.f32.mrb[0].mxu0
    %193 = vdwg.mxu0
    %194 = vst [vmem:[#allocation7] sm:$0xff] %v186
    %195 = vst [vmem:[#allocation7 + $0x8] sm:$0xff] %v191
    // Predicated region
    $region30: #{tpu_custom_call.1} parent=1 // pred_check
      _
    $region31: #{tpu_custom_call.1} parent=1 // pred_check_branch
      %197 = sbr.rel (0) target = $region33
    $region32: #{tpu_custom_call.1} parent=1 // pred_region
      %s199 = ssub.s32 256, 256
      %200 = vsyncadd [#allocation4], %s199
      %s201 = sshll.u32 [#allocation7], 4
      %s202 = int_to_ptr.vmem [resolvable:$true] %s201
      %207 = dma.vmem_to_hbm [thread:$0]  %s202, 256, %s5, [#allocation4], 128, 128, 8
    $region33: #{tpu_custom_call.1} parent=1 // pred_fallthru
      _
    // Predicated region
    $region34: #{tpu_custom_call.1} parent=1 // pred_check
      _
    $region35: #{tpu_custom_call.1} parent=1 // pred_check_branch
      %209 = sbr.rel (0) target = $region37
    $region36: #{tpu_custom_call.1} parent=1 // pred_region
      %210 = dma.done [#allocation4], 256
    $region37: #{tpu_custom_call.1} parent=1 // pred_fallthru
      _
    %211 = vsyncpa [#allocation3], 1
    %212 = vsyncpa [#allocation6], 1
    %213 = vsyncpa [#allocation4], 1

</llo_original>
